<compile_context>
chip_gen: v6e
topology: v6e:2x2x1
jax: 0.10.0
libtpu: 0.0.40
codegen_flags: <defaults>
</compile_context>

<pallas_src>
import functools

import jax
import jax.numpy as jnp
from jax.experimental import pallas as pl
from jax.experimental.pallas import tpu as pltpu


def _focus_conv_kernel(xcol_ref, w_ref, b_ref, o_ref):
    """One im2col matmul for one (batch, spatial-strip) grid step.

    xcol_ref: (1, K, Tn)   bf16 im2col columns (K=9*Cin on sublanes, Tn on lanes)
    w_ref   : (Cout, K)    bf16 reshaped conv weights
    b_ref   : (Cout, 1)    f32 bias
    o_ref   : (1, Cout, Tn) f32 NCHW-flat output strip (lane-dense store)
    """
    acc = jnp.dot(w_ref[...], xcol_ref[0],
                  preferred_element_type=jnp.float32)        # (Cout, Tn) f32
    o_ref[0] = (acc + b_ref[...]).astype(o_ref.dtype)


def _pick_strip(n, target=512):
    """Largest strip <= target that tiles n exactly (lane-aligned when split)."""
    if n <= target:
        return n
    for t in (512, 384, 256, 128):
        if n % t == 0:
            return t
    return n  # fall back to whole image


@jax.jit
def focus_forward(x, weight, bias):
    """x: (B, C, H, W) NCHW f32.  weight: (Cout, 4C, 3, 3).  bias: (Cout,).

    Returns (B, Cout, H//2, W//2) NCHW, matching PyTorch Focus.forward.
    """
    B, C, H, W = x.shape
    Cout, Cin, KH, KW = weight.shape
    assert Cin == 4 * C and KH == 3 and KW == 3
    assert H % 2 == 0 and W % 2 == 0, "Focus requires even spatial dims"
    Ho, Wo = H // 2, W // 2
    N = Ho * Wo
    K = 9 * Cin

    # ---- wrapper glue (fused under jit): space-to-depth + pad + im2col ----
    x_sd = jnp.concatenate(
        [x[:, :, ::2, ::2],
         x[:, :, 1::2, ::2],
         x[:, :, ::2, 1::2],
         x[:, :, 1::2, 1::2]],
        axis=1,
    )                                                   # (B, 4C, Ho, Wo)
    x_pad = jnp.pad(x_sd, ((0, 0), (0, 0), (1, 1), (1, 1)))

    # im2col, channels-first: row index = (kh*3+kw)*Cin + c, col = i*Wo + j.
    taps = [x_pad[:, :, kh:kh + Ho, kw:kw + Wo]
            for kh in range(3) for kw in range(3)]       # 9 x (B, Cin, Ho, Wo)
    x_col = jnp.stack(taps, axis=1).reshape(B, K, N)     # (B, 9*Cin, Ho*Wo)
    x_col = x_col.astype(jnp.bfloat16)

    # Torch weight (Cout, Cin, kh, kw) -> (Cout, kh, kw, Cin) -> (Cout, 9*Cin),
    # matching the im2col row ordering above.
    w2 = jnp.transpose(weight, (0, 2, 3, 1)).reshape(Cout, K).astype(jnp.bfloat16)
    b2 = bias.reshape(Cout, 1).astype(jnp.float32)

    # ---- spatial strip tiling ----
    Tn = _pick_strip(N)
    n_strips = N // Tn

    out_flat = pl.pallas_call(
        _focus_conv_kernel,
        out_shape=jax.ShapeDtypeStruct((B, Cout, N), jnp.float32),
        grid_spec=pltpu.PrefetchScalarGridSpec(
            num_scalar_prefetch=0,
            grid=(B, n_strips),
            in_specs=[
                pl.BlockSpec((1, K, Tn), lambda b, n: (b, 0, n)),
                pl.BlockSpec((Cout, K), lambda b, n: (0, 0)),
                pl.BlockSpec((Cout, 1), lambda b, n: (0, 0)),
            ],
            out_specs=pl.BlockSpec((1, Cout, Tn), lambda b, n: (b, 0, n)),
        ),
        compiler_params=pltpu.CompilerParams(
            dimension_semantics=("parallel", "parallel"),
            vmem_limit_bytes=32 * 1024 * 1024,
        ),
    )(x_col, w2, b2)

    # Free contiguous reshape (no transpose) to NCHW.
    return out_flat.reshape(B, Cout, Ho, Wo)


def _reference_forward(x, weight, bias):
    """Pure-JAX f32 reference (lax.conv) for a correctness check."""
    x_sd = jnp.concatenate(
        [x[:, :, ::2, ::2],
         x[:, :, 1::2, ::2],
         x[:, :, ::2, 1::2],
         x[:, :, 1::2, 1::2]],
        axis=1,
    )
    y = jax.lax.conv_general_dilated(
        x_sd, weight, window_strides=(1, 1), padding=((1, 1), (1, 1)),
        dimension_numbers=("NCHW", "OIHW", "NCHW"))
    return y + bias.reshape(1, -1, 1, 1)


if __name__ == "__main__":
    key = jax.random.PRNGKey(0)
    k_x, k_w, k_b = jax.random.split(key, 3)

    B, C, H, W = 2, 3, 16, 16          # input (NCHW); Focus halves spatial dims
    Cout, Cin = 64, 4 * C              # conv: out=64, in=4*C, k=3, pad=1, s=1

    x = jax.random.normal(k_x, (B, C, H, W), dtype=jnp.float32)
    # Deterministic, conv-like init (uniform in +/- 1/sqrt(fan_in)).
    fan_in = Cin * 3 * 3
    bound = 1.0 / (fan_in ** 0.5)
    weight = jax.random.uniform(k_w, (Cout, Cin, 3, 3), jnp.float32,
                                minval=-bound, maxval=bound)
    bias = jax.random.uniform(k_b, (Cout,), jnp.float32,
                              minval=-bound, maxval=bound)

    out = jax.block_until_ready(focus_forward(x, weight, bias))
    ref = jax.block_until_ready(_reference_forward(x, weight, bias))

    assert out.shape == (B, Cout, H // 2, W // 2)
    # bf16 activations/weights with f32 accumulation -> relaxed tolerance.
    assert jnp.max(jnp.abs(out - ref)) < 3e-2

    print("KERNEL_OK")
</pallas_src>

<mosaic_0001>
module attributes {stable_mosaic.version = 11 : i64} {
  func.func @_focus_conv_kernel(%arg0: i32, %arg1: i32, %arg2: memref<1x108x64xbf16, #tpu.memory_space<vmem>>, %arg3: memref<64x108xbf16, #tpu.memory_space<vmem>>, %arg4: memref<64x1xf32, #tpu.memory_space<vmem>>, %arg5: memref<1x64x64xf32, #tpu.memory_space<vmem>>) attributes {dimension_semantics = [#tpu.dimension_semantics<parallel>, #tpu.dimension_semantics<parallel>], iteration_bounds = array<i64: 2, 1>, scalar_prefetch = 0 : i64, scratch_operands = 0 : i64, tpu.core_type = #tpu.core_type<tc>, window_params = [{transform_indices = @transform_0, window_bounds = array<i64: 1, 108, 64>}, {pipeline_mode = #tpu.pipeline_mode<synchronous>, transform_indices = @transform_1, window_bounds = array<i64: 64, 108>}, {pipeline_mode = #tpu.pipeline_mode<synchronous>, transform_indices = @transform_2, window_bounds = array<i64: 64, 1>}, {transform_indices = @transform_3, window_bounds = array<i64: 1, 64, 64>}]} {
    %c0 = arith.constant 0 : index
    %c0_0 = arith.constant 0 : index
    %0 = vector.load %arg3[%c0, %c0_0] : memref<64x108xbf16, #tpu.memory_space<vmem>>, vector<64x108xbf16>
    %c0_1 = arith.constant 0 : index
    %c0_2 = arith.constant 0 : index
    %c0_3 = arith.constant 0 : index
    %1 = vector.load %arg2[%c0_1, %c0_2, %c0_3] : memref<1x108x64xbf16, #tpu.memory_space<vmem>>, vector<1x108x64xbf16>
    %2 = vector.shape_cast %1 : vector<1x108x64xbf16> to vector<108x64xbf16>
    %cst = arith.constant dense<0.000000e+00> : vector<64x64xf32>
    %3 = tpu.matmul %0, %2, %cst {dimension_numbers = #tpu.dot_dimension_numbers<[1], [0], [0], [1], [0, 0, 1, 1], [], []>} : vector<64x108xbf16>, vector<108x64xbf16>, vector<64x64xf32> -> vector<64x64xf32>
    %c0_4 = arith.constant 0 : index
    %c0_5 = arith.constant 0 : index
    %4 = vector.load %arg4[%c0_4, %c0_5] : memref<64x1xf32, #tpu.memory_space<vmem>>, vector<64x1xf32>
    %5 = vector.broadcast %4 : vector<64x1xf32> to vector<64x64xf32>
    %6 = arith.addf %3, %5 : vector<64x64xf32>
    %c0_6 = arith.constant 0 : index
    %c0_7 = arith.constant 0 : index
    %c0_8 = arith.constant 0 : index
    %7 = vector.load %arg5[%c0_6, %c0_7, %c0_8] : memref<1x64x64xf32, #tpu.memory_space<vmem>>, vector<1x64x64xf32>
    %8 = vector.shape_cast %7 : vector<1x64x64xf32> to vector<64x64xf32>
    %9 = vector.shape_cast %6 : vector<64x64xf32> to vector<1x64x64xf32>
    tpu.vector_store %arg5[%c0_6, %c0_7, %c0_8], %9 {strides = array<i32>} : memref<1x64x64xf32, #tpu.memory_space<vmem>>, vector<1x64x64xf32>,
    return
  }
  func.func @transform_0(%arg0: i32, %arg1: i32) -> (i32, i32, i32) {
    %c0_i32 = arith.constant 0 : i32
    %c0_i32_0 = arith.constant 0 : i32
    return %arg0, %c0_i32, %arg1 : i32, i32, i32
  }
  func.func @transform_1(%arg0: i32, %arg1: i32) -> (i32, i32) {
    %c0_i32 = arith.constant 0 : i32
    %c0_i32_0 = arith.constant 0 : i32
    %c0_i32_1 = arith.constant 0 : i32
    return %c0_i32, %c0_i32_0 : i32, i32
  }
  func.func @transform_2(%arg0: i32, %arg1: i32) -> (i32, i32) {
    %c0_i32 = arith.constant 0 : i32
    %c0_i32_0 = arith.constant 0 : i32
    %c0_i32_1 = arith.constant 0 : i32
    return %c0_i32, %c0_i32_0 : i32, i32
  }
  func.func @transform_3(%arg0: i32, %arg1: i32) -> (i32, i32, i32) {
    %c0_i32 = arith.constant 0 : i32
    %c0_i32_0 = arith.constant 0 : i32
    return %arg0, %c0_i32, %arg1 : i32, i32, i32
  }
}

</mosaic_0001>

<llo_original>
// kernel: focus_forward.1
$region0: #{focus_forward.1}
  #allocation0 [shape = 'u32[]', space=smem, size = 0x4, offset = 0x4, fixed_abs, tag = 'smem constant byte address 0x4 - core index']
  #allocation1 [shape = 'u32[144,128]{1,0:T(1,128)}', space=vmem, size = 0x12000, scoped, tag = 'internal scratch']
  %s0 = inlined_call_operand.vmem [shape: bf16[2,108,64], index: 0, kind: input, shape index: {}]
  %s1 = inlined_call_operand.vmem [shape: bf16[64,108], index: 1, kind: input, shape index: {}]
  %s2 = inlined_call_operand.vmem [shape: f32[64,1], index: 2, kind: input, shape index: {}]
  %s3 = inlined_call_operand.vmem [shape: f32[2,64,64], index: 3, kind: output, shape index: {}]
  %s4 = sld [smem:[#allocation0]]
  $region45: #{focus_forward.1} parent=0
    _
  %s6 = ssub.s32 1, %s4
  %s7 = scalar_select 0, %s6, %s4
  loop: start=0, step=1, limit=4
  $region2: #{focus_forward.1} parent=0 // loop_pre_header
    _
  $region3: #{focus_forward.1} parent=0 // loop_header
    %s9 = sphi 0, %s13
    %p10 = scmp.ge.s32.totalorder %s9, 4
    %s16 = sphi 0, %s28
    %s17 = sphi 0, %s24
    %s18 = sphi 0, %s16
    %s19 = sphi 0, %s17
    %s20 = sphi 0, %s18
    %s21 = sphi 0, %s19
    %s33 = sphi 0, %s35
    %s36 = sphi 0, %s33
    %s37 = sphi 0, %s36
    %s53 = sphi 0, %s37
    %s57 = sphi 0, %s57
    %s59 = sphi 0, %s57
    %s60 = sphi 0, %s59
    %s74 = sphi 0, %s60
    %s78 = sphi 0, %s78
    %s80 = sphi 0, %s78
    %s81 = sphi 0, %s80
    %s95 = sphi 0, %s81
    %s103 = sphi 0, %s105
    %s106 = sphi 0, %s103
    %s107 = sphi 0, %s106
    %s123 = sphi 0, %s107
  $region4: #{focus_forward.1} parent=0 // loop_header_branch
    %12 = sbr.rel (%p10) target = $region8
  $region5: #{focus_forward.1} parent=0 // loop_body
    %s14 = ssub.s32 %s9, 1
    %s15 = ssub.s32 %s9, 2
    %s22 = sadd.s32 1, %s17
    %p23 = scmp.ge.s32.totalorder %s22, 1
    %s24 = scalar_select %p23, 0, %s22
    %s25 = sadd.s32 1, %s16
    %s26 = scalar_select %p23, %s25, %s16
    %p27 = scmp.ge.s32.totalorder %s26, 2
    %s28 = scalar_select %p27, 0, %s26
    %s29 = ssub.s32 %s16, %s28
    %s30 = ssub.s32 %s17, %s24
    %s31 = sor.u32 %s29, %s30
    %p32 = scmp.eq.s32.totalorder %s31, 0
    %s34 = sadd.s32 %s33, 1
    %s35 = scalar_select %p32, %s33, %s34
    %p38 = pneg %p32
    %p39 = scmp.eq.s32.totalorder %s9, 1
    %p40 = por %p38, %p39
    %p41 = scmp.ne.s32.totalorder %s33, %s36
    %p42 = scmp.eq.s32.totalorder %s9, 0
    %p43 = por %p41, %p42
    %p44 = scmp.ne.s32.totalorder %s33, %s36
    %p45 = scmp.eq.s32.totalorder %s14, 1
    %p46 = por %p44, %p45
    %p47 = scmp.ne.s32.totalorder %s36, %s37
    %p48 = scmp.eq.s32.totalorder %s14, 0
    %p49 = por %p47, %p48
    %p50 = scmp.ne.s32.totalorder %s36, %s37
    %p51 = scmp.eq.s32.totalorder %s15, 1
    %p52 = por %p50, %p51
    %p54 = scmp.ne.s32.totalorder %s37, %s53
    %p55 = scmp.eq.s32.totalorder %s15, 0
    %p56 = por %p54, %p55
    %s58 = sadd.s32 %s57, 1
    %p61 = scmp.eq.s32.totalorder %s9, 1
    %p62 = scmp.ne.s32.totalorder %s57, %s59
    %p63 = scmp.eq.s32.totalorder %s9, 0
    %p64 = por %p62, %p63
    %p65 = scmp.ne.s32.totalorder %s57, %s59
    %p66 = scmp.eq.s32.totalorder %s14, 1
    %p67 = por %p65, %p66
    %p68 = scmp.ne.s32.totalorder %s59, %s60
    %p69 = scmp.eq.s32.totalorder %s14, 0
    %p70 = por %p68, %p69
    %p71 = scmp.ne.s32.totalorder %s59, %s60
    %p72 = scmp.eq.s32.totalorder %s15, 1
    %p73 = por %p71, %p72
    %p75 = scmp.ne.s32.totalorder %s60, %s74
    %p76 = scmp.eq.s32.totalorder %s15, 0
    %p77 = por %p75, %p76
    %s79 = sadd.s32 %s78, 1
    %p82 = scmp.eq.s32.totalorder %s9, 1
    %p83 = scmp.ne.s32.totalorder %s78, %s80
    %p84 = scmp.eq.s32.totalorder %s9, 0
    %p85 = por %p83, %p84
    %p86 = scmp.ne.s32.totalorder %s78, %s80
    %p87 = scmp.eq.s32.totalorder %s14, 1
    %p88 = por %p86, %p87
    %p89 = scmp.ne.s32.totalorder %s80, %s81
    %p90 = scmp.eq.s32.totalorder %s14, 0
    %p91 = por %p89, %p90
    %p92 = scmp.ne.s32.totalorder %s80, %s81
    %p93 = scmp.eq.s32.totalorder %s15, 1
    %p94 = por %p92, %p93
    %p96 = scmp.ne.s32.totalorder %s81, %s95
    %p97 = scmp.eq.s32.totalorder %s15, 0
    %p98 = por %p96, %p97
    %s99 = ssub.s32 %s16, %s28
    %s100 = ssub.s32 %s17, %s24
    %s101 = sor.u32 %s99, %s100
    %p102 = scmp.eq.s32.totalorder %s101, 0
    %s104 = sadd.s32 %s103, 1
    %s105 = scalar_select %p102, %s103, %s104
    %p108 = pneg %p102
    %p109 = scmp.eq.s32.totalorder %s9, 1
    %p110 = por %p108, %p109
    %p111 = scmp.ne.s32.totalorder %s103, %s106
    %p112 = scmp.eq.s32.totalorder %s9, 0
    %p113 = por %p111, %p112
    %p114 = scmp.ne.s32.totalorder %s103, %s106
    %p115 = scmp.eq.s32.totalorder %s14, 1
    %p116 = por %p114, %p115
    %p117 = scmp.ne.s32.totalorder %s106, %s107
    %p118 = scmp.eq.s32.totalorder %s14, 0
    %p119 = por %p117, %p118
    %p120 = scmp.ne.s32.totalorder %s106, %s107
    %p121 = scmp.eq.s32.totalorder %s15, 1
    %p122 = por %p120, %p121
    %p124 = scmp.ne.s32.totalorder %s107, %s123
    %p125 = scmp.eq.s32.totalorder %s15, 0
    %p126 = por %p124, %p125
    %p127 = scmp.le.s32.totalorder 1, %s9
    %p128 = scmp.lt.s32.totalorder %s9, 3
    %p129 = pnand %p127, %p128
    %p130 = pneg %p129
    // Predicated region
    $region9: #{focus_forward.1} parent=5 // pred_check
      _
    $region10: #{focus_forward.1} parent=5 // pred_check_branch
      %132 = sbr.rel (%p129) target = $region12
    $region11: #{focus_forward.1} parent=5 // pred_region
      %s133 = ssub.s32 %s9, 1
      // Predicated region
      $region13: #{focus_forward.1} parent=11 // pred_check
        %p134 = pneg %p70
      $region14: #{focus_forward.1} parent=11 // pred_check_branch
        %136 = sbr.rel (%p134) target = $region16
      $region15: #{focus_forward.1} parent=11 // pred_region
        _
      $region16: #{focus_forward.1} parent=11 // pred_fallthru
        _
      // Predicated region
      $region17: #{focus_forward.1} parent=11 // pred_check
        %p137 = pneg %p91
      $region18: #{focus_forward.1} parent=11 // pred_check_branch
        %139 = sbr.rel (%p137) target = $region20
      $region19: #{focus_forward.1} parent=11 // pred_region
        _
      $region20: #{focus_forward.1} parent=11 // pred_fallthru
        _
    $region12: #{focus_forward.1} parent=5 // pred_fallthru
      _
    %p140 = scmp.lt.s32.totalorder %s9, 2
    // Predicated region
    $region21: #{focus_forward.1} parent=5 // pred_check
      %p141 = pneg %p140
    $region22: #{focus_forward.1} parent=5 // pred_check_branch
      %143 = sbr.rel (%p141) target = $region24
    $region23: #{focus_forward.1} parent=5 // pred_region
      // Predicated region
      $region25: #{focus_forward.1} parent=23 // pred_check
        %p144 = pneg %p43
      $region26: #{focus_forward.1} parent=23 // pred_check_branch
        %146 = sbr.rel (%p144) target = $region28
      $region27: #{focus_forward.1} parent=23 // pred_region
        %p147 = scmp.lt.s32.totalorder %s16, 1
        %s148 = scalar_select %p147, %s16, 1
        %p149 = scmp.lt.s32.totalorder %s17, 0
        %s150 = scalar_select %p149, %s17, 0
        %s151 = smul.addr %s148, 14
        %s152 = sadd.s32 %s150, %s151
        %s153 = smul.addr %s152, 4
        %s154 = scalar_lea.vmem %s0, %s153
      $region28: #{focus_forward.1} parent=23 // pred_fallthru
        _
    $region24: #{focus_forward.1} parent=5 // pred_fallthru
      _
    %p155 = scmp.le.s32.totalorder 1, %s9
    %p156 = scmp.lt.s32.totalorder %s9, 3
    %p157 = pnand %p155, %p156
    %p158 = pneg %p157
    // Predicated region
    $region29: #{focus_forward.1} parent=5 // pred_check
      _
    $region30: #{focus_forward.1} parent=5 // pred_check_branch
      %160 = sbr.rel (%p157) target = $region32
    $region31: #{focus_forward.1} parent=5 // pred_region
      %s161 = ssub.s32 %s9, 1
      %p162 = scmp.lt.s32.totalorder %s18, 1
      %s163 = scalar_select %p162, %s18, 1
      %p164 = scmp.lt.s32.totalorder %s19, 0
      %s165 = scalar_select %p164, %s19, 0
      %s166 = smul.addr %s163, 14
      %s167 = sadd.s32 %s165, %s166
      %s168 = smul.addr %s167, 4
      %s169 = scalar_lea.vmem %s0, %s168
      %p170 = pneg %p49
      %p171 = pneg %p46
      %p172 = pneg %p70
      %p173 = pneg %p67
      %p174 = pneg %p91
      %p175 = pneg %p88
      %p176 = pneg %p119
      %p177 = pneg %p116
      %p178 = scmp.lt.s32.totalorder %s18, 1
      %s179 = scalar_select %p178, %s18, 1
      %p180 = scmp.lt.s32.totalorder %s19, 0
      %s181 = scalar_select %p180, %s19, 0
      %s182 = smul.addr %s179, 8
      %s183 = sadd.s32 %s181, %s182
      %s184 = smul.addr %s183, 8
      %s185 = scalar_lea.vmem %s3, %s184
      %p186 = scmp.lt.s32.totalorder %s18, 1
      %s187 = scalar_select %p186, %s18, 1
      %p188 = scmp.lt.s32.totalorder %s19, 0
      %s189 = scalar_select %p188, %s19, 0
      %s190 = smul.addr %s187, 14
      %s191 = sadd.s32 %s189, %s190
      %s192 = smul.addr %s191, 4
      %s193 = scalar_lea.vmem %s0, %s192
      %p194 = scmp.lt.s32.totalorder %s18, 1
      %s195 = scalar_select %p194, %s18, 1
      %p196 = scmp.lt.s32.totalorder %s19, 0
      %s197 = scalar_select %p196, %s19, 0
      %s198 = smul.addr %s195, 8
      %s199 = sadd.s32 %s197, %s198
      %s200 = smul.addr %s199, 8
      %s201 = scalar_lea.vmem %s3, %s200
      %v203 = vld [vmem:[%s1] sm:$0xf]
      %v204 = vld [vmem:[%s1 + $0x4] sm:$0xf]
      %v205 = vld [vmem:[%s1 + $0x8] sm:$0xf]
      %v206 = vld [vmem:[%s1 + $0xc] sm:$0xf]
      %v207 = vld [vmem:[%s1 + $0x10] sm:$0xf]
      %v208 = vld [vmem:[%s1 + $0x14] sm:$0xf]
      %v209 = vld [vmem:[%s1 + $0x18] sm:$0xf]
      %v210 = vld [vmem:[%s1 + $0x1c] sm:$0xf]
      %v211 = vld [vmem:[%s193] sm:$0xf]
      %v212 = vld [vmem:[%s193 + $0x4] sm:$0xf]
      %v213 = vld [vmem:[%s193 + $0x8] sm:$0xf]
      %v214 = vld [vmem:[%s193 + $0xc] sm:$0xf]
      %v215 = vld [vmem:[%s193 + $0x10] sm:$0xf]
      %v216 = vld [vmem:[%s193 + $0x14] sm:$0xf]
      %v217 = vld [vmem:[%s193 + $0x18] sm:$0xf]
      %v218 = vld [vmem:[%s193 + $0x1c] sm:$0xf]
      %v219 = vld [vmem:[%s193 + $0x20] sm:$0xf]
      %v220 = vld [vmem:[%s193 + $0x24] sm:$0xf]
      %v221 = vld [vmem:[%s193 + $0x28] sm:$0xf]
      %v222 = vld [vmem:[%s193 + $0x2c] sm:$0xf]
      %v223 = vld [vmem:[%s193 + $0x30] sm:$0xf]
      %v224 = vld [vmem:[%s193 + $0x34] sm:$0x3]
      %v225 = vld [vmem:[%s2] sm:$0xff]
      %v226 = vld [vmem:[%s2 + $0x8] sm:$0xff]
      %v227 = vld [vmem:[%s2 + $0x10] sm:$0xff]
      %v228 = vld [vmem:[%s2 + $0x18] sm:$0xff]
      %v229 = vld [vmem:[%s2 + $0x20] sm:$0xff]
      %v230 = vld [vmem:[%s2 + $0x28] sm:$0xff]
      %v231 = vld [vmem:[%s2 + $0x30] sm:$0xff]
      %v232 = vld [vmem:[%s2 + $0x38] sm:$0xff]
      %234 = vset.pattern.permute.xlu0 0
      %235 = vperm.xlu0 %234, %v225
      %v236 = vpop.permute.xlu0 %235
      %239 = vset.pattern.permute.xlu0 0
      %240 = vperm.xlu0 %239, %v226
      %v241 = vpop.permute.xlu0 %240
      %244 = vset.pattern.permute.xlu0 0
      %245 = vperm.xlu0 %244, %v227
      %v246 = vpop.permute.xlu0 %245
      %249 = vset.pattern.permute.xlu0 0
      %250 = vperm.xlu0 %249, %v228
      %v251 = vpop.permute.xlu0 %250
      %254 = vset.pattern.permute.xlu0 0
      %255 = vperm.xlu0 %254, %v229
      %v256 = vpop.permute.xlu0 %255
      %259 = vset.pattern.permute.xlu0 0
      %260 = vperm.xlu0 %259, %v230
      %v261 = vpop.permute.xlu0 %260
      %264 = vset.pattern.permute.xlu0 0
      %265 = vperm.xlu0 %264, %v231
      %v266 = vpop.permute.xlu0 %265
      %269 = vset.pattern.permute.xlu0 0
      %270 = vperm.xlu0 %269, %v232
      %v271 = vpop.permute.xlu0 %270
      %v281 = vunpack.c.l.b16 %v203
      %v282 = vunpack.c.l.b16 %v204
      %v283 = vunpack.c.l.b16 %v205
      %v284 = vunpack.c.l.b16 %v206
      %v285 = vunpack.c.l.b16 %v207
      %v286 = vunpack.c.l.b16 %v208
      %v287 = vunpack.c.l.b16 %v209
      %v288 = vunpack.c.l.b16 %v210
      %v289 = vpack.c.b16 %v282, %v281
      %v290 = vpack.c.b16 %v284, %v283
      %v291 = vpack.c.b16 %v286, %v285
      %v292 = vpack.c.b16 %v288, %v287
      %v307 = vunpack.c.l.b16 %v211
      %v308 = vunpack.c.l.b16 %v212
      %v309 = vunpack.c.l.b16 %v213
      %v310 = vunpack.c.l.b16 %v214
      %v311 = vunpack.c.l.b16 %v215
      %v312 = vunpack.c.l.b16 %v216
      %v313 = vunpack.c.l.b16 %v217
      %v314 = vunpack.c.l.b16 %v218
      %v315 = vunpack.c.l.b16 %v219
      %v316 = vunpack.c.l.b16 %v220
      %v317 = vunpack.c.l.b16 %v221
      %v318 = vunpack.c.l.b16 %v222
      %v319 = vunpack.c.l.b16 %v223
      %v320 = vunpack.c.l.b16 %v224
      %v321 = vpack.c.b16 %v308, %v307
      %v322 = vpack.c.b16 %v310, %v309
      %v323 = vpack.c.b16 %v312, %v311
      %v324 = vpack.c.b16 %v314, %v313
      %v325 = vpack.c.b16 %v316, %v315
      %v326 = vpack.c.b16 %v318, %v317
      %v327 = vpack.c.b16 %v320, %v319
      %vm334 = vcmask 883712
      %v336 = vsel %vm334, %v289, 0
      %v339 = vsel %vm334, %v290, 0
      %v342 = vsel %vm334, %v291, 0
      %v345 = vsel %vm334, %v292, 0
      %vm347 = vcmask 1045504
      %v349 = vsel %vm347, %v327, 0
      %351 = vmatprep.subr.bf16.mxu0 0
      %352 = vmatpush1.bf16.msra.mxu0 0
      %353 = vmatprep.subr.bf16.mxu0 0
      %354 = vmatpush1.bf16.msra.mxu0 %v349
      %355 = vmatprep.subr.bf16.mxu0 0
      %356 = vmatpush1.bf16.msra.mxu0 %v326
      %357 = vmatprep.subr.bf16.mxu0 0
      %358 = vmatpush1.bf16.msra.mxu0 %v325
      %359 = vmatprep.subr.bf16.mxu0 0
      %360 = vmatpush1.bf16.msra.mxu0 %v324
      %361 = vmatprep.subr.bf16.mxu0 0
      %362 = vmatpush1.bf16.msra.mxu0 %v323
      %363 = vmatprep.subr.bf16.mxu0 0
      %364 = vmatpush1.bf16.msra.mxu0 %v322
      %365 = vmatprep.subr.bf16.mxu0 0
      %366 = vmatpush1.bf16.msra.mxu0 %v321
      %367 = vmatprep.subr.bf16.mxu0 0
      %368 = vmatpush2.bf16.msra.mxu0 0
      %369 = vmatprep.subr.bf16.mxu0 0
      %370 = vmatpush2.bf16.msra.mxu0 0
      %371 = vmatprep.subr.bf16.mxu0 0
      %372 = vmatpush2.bf16.msra.mxu0 0
      %373 = vmatprep.subr.bf16.mxu0 0
      %374 = vmatpush2.bf16.msra.mxu0 0
      %375 = vmatprep.subr.bf16.mxu0 0
      %376 = vmatpush2.bf16.msra.mxu0 0
      %377 = vmatprep.subr.bf16.mxu0 0
      %378 = vmatpush2.bf16.msra.mxu0 0
      %379 = vmatprep.subr.bf16.mxu0 0
      %380 = vmatpush2.bf16.msra.mxu0 0
      %381 = vmatprep.subr.bf16.mxu0 0
      %382 = vmatpush2.bf16.msra.mxu0 0
      %383 = vmatprep.mubr.bf16.mxu0 0
      %384 = vmatmul.mubr.bf16.gmra.mxu0 %v336
      %v385 = vpop.f32.mrf.mxu0
      %v386 = vadd.f32 %v236, %v385
      %v387 = vpop.f32.mrf.mxu0
      %v388 = vpop.f32.mrf.mxu0
      %v389 = vadd.f32 %v241, %v388
      %v390 = vpop.f32.mrf.mxu0
      %391 = vmatprep.mubr.bf16.mxu0 0
      %392 = vmatmul.mubr.bf16.gmra.mxu0 %v339
      %v393 = vpop.f32.mrf.mxu0
      %v394 = vadd.f32 %v246, %v393
      %v395 = vpop.f32.mrf.mxu0
      %v396 = vpop.f32.mrf.mxu0
      %v397 = vadd.f32 %v251, %v396
      %v398 = vpop.f32.mrf.mxu0
      %399 = vmatprep.mubr.bf16.mxu0 0
      %400 = vmatmul.mubr.bf16.gmra.mxu0 %v342
      %v401 = vpop.f32.mrf.mxu0
      %v402 = vadd.f32 %v256, %v401
      %v403 = vpop.f32.mrf.mxu0
      %v404 = vpop.f32.mrf.mxu0
      %v405 = vadd.f32 %v261, %v404
      %v406 = vpop.f32.mrf.mxu0
      %407 = vmatprep.mubr.bf16.mxu0 0
      %408 = vmatmul.mubr.bf16.gmra.mxu0 %v345
      %v409 = vpop.f32.mrf.mxu0
      %v410 = vadd.f32 %v266, %v409
      %v411 = vpop.f32.mrf.mxu0
      %v412 = vpop.f32.mrf.mxu0
      %v413 = vadd.f32 %v271, %v412
      %v414 = vpop.f32.mrf.mxu0
      %415 = vdwg.mxu0
      %vm416 = vcmask 523264
      %417 = vst.msk [vmem:[%s201] sm:$0xff] %vm416, %v386
      %418 = vst.msk [vmem:[%s201 + $0x8] sm:$0xff] %vm416, %v389
      %419 = vst.msk [vmem:[%s201 + $0x10] sm:$0xff] %vm416, %v394
      %420 = vst.msk [vmem:[%s201 + $0x18] sm:$0xff] %vm416, %v397
      %421 = vst.msk [vmem:[%s201 + $0x20] sm:$0xff] %vm416, %v402
      %422 = vst.msk [vmem:[%s201 + $0x28] sm:$0xff] %vm416, %v405
      %423 = vst.msk [vmem:[%s201 + $0x30] sm:$0xff] %vm416, %v410
      %424 = vst.msk [vmem:[%s201 + $0x38] sm:$0xff] %vm416, %v413
      %p425 = scmp.lt.s32.totalorder %s18, 1
      %s426 = scalar_select %p425, %s18, 1
      %p427 = scmp.lt.s32.totalorder %s19, 0
      %s428 = scalar_select %p427, %s19, 0
      %s429 = smul.addr %s426, 8
      %s430 = sadd.s32 %s428, %s429
      %s431 = smul.addr %s430, 8
      %s432 = scalar_lea.vmem %s3, %s431
      // Predicated region
      $region33: #{focus_forward.1} parent=31 // pred_check
        %p433 = pneg %p116
      $region34: #{focus_forward.1} parent=31 // pred_check_branch
        %435 = sbr.rel (%p433) target = $region36
      $region35: #{focus_forward.1} parent=31 // pred_region
        _
      $region36: #{focus_forward.1} parent=31 // pred_fallthru
        _
    $region32: #{focus_forward.1} parent=5 // pred_fallthru
      _
    %p436 = scmp.le.s32.totalorder 2, %s9
    // Predicated region
    $region37: #{focus_forward.1} parent=5 // pred_check
      %p437 = pneg %p436
    $region38: #{focus_forward.1} parent=5 // pred_check_branch
      %439 = sbr.rel (%p437) target = $region40
    $region39: #{focus_forward.1} parent=5 // pred_region
      %s440 = ssub.s32 %s9, 2
      // Predicated region
      $region41: #{focus_forward.1} parent=39 // pred_check
        %p441 = pneg %p122
      $region42: #{focus_forward.1} parent=39 // pred_check_branch
        %443 = sbr.rel (%p441) target = $region44
      $region43: #{focus_forward.1} parent=39 // pred_region
        %p444 = scmp.lt.s32.totalorder %s20, 1
        %s445 = scalar_select %p444, %s20, 1
        %p446 = scmp.lt.s32.totalorder %s21, 0
        %s447 = scalar_select %p446, %s21, 0
        %s448 = smul.addr %s445, 8
        %s449 = sadd.s32 %s447, %s448
        %s450 = smul.addr %s449, 8
        %s451 = scalar_lea.vmem %s3, %s450
      $region44: #{focus_forward.1} parent=39 // pred_fallthru
        _
    $region40: #{focus_forward.1} parent=5 // pred_fallthru
      _
  $region6: #{focus_forward.1} parent=0 // loop_footer
    %s13 = sadd.s32 1, %s9
  $region7: #{focus_forward.1} parent=0 // loop_footer_branch
    %8 = sbr.rel target = $region3
  $region8: #{focus_forward.1} parent=0 // loop_exit
    _

</llo_original>
